<compile_context>
chip_gen: v6e
topology: v6e:2x2x1
jax: 0.10.0
libtpu: 0.0.40
codegen_flags: <defaults>
</compile_context>

<pallas_src>
import functools
import math

import jax
import jax.numpy as jnp
from jax.experimental import pallas as pl
from jax.experimental.pallas import tpu as pltpu

LANE = 128
OUT_R = 8              # accumulator sublane rows -> 4 KiB f32 resident output block
BLOCK_R_SAFE = 2048    # (1, 2048, 128) f32 = 1 MiB per input per buffer; safe everywhere


def _round_up(x, m):
    return (x + m - 1) // m * m


def _block_cfg():
    """Return (block_r_max, vmem_limit_bytes | None), gated by TPU generation.

    v7x (64 MiB VMEM, ~3.2 TB/s per TC): bigger blocks to amortize the ~0.35us
    per-grid-step overhead; raise the scoped-VMEM limit explicitly.
    v5e/v6e (128 MiB VMEM): 1 MiB blocks already sit near the HBM roofline and
    stay under v5e's 16 MiB scoped default, so keep the safe size.
    """
    try:
        vmem = int(pltpu.get_tpu_info().vmem_capacity_bytes)
    except Exception:
        return BLOCK_R_SAFE, None
    if vmem <= (64 << 20):          # v7x-class
        return 8192, 32 << 20       # 2 inputs x 2 buffers x 4 MiB = 16 MiB
    return BLOCK_R_SAFE, None       # v5e / v6e


def _bce_kernel(pred_ref, label_ref, out_ref, *,
                from_sigmoid, ignore_label, r_total, block_r, scale):
    rb = pl.program_id(1)
    num_rb = pl.num_programs(1)

    # Initialize the resident accumulator block on the first feature block.
    @pl.when(rb == 0)
    def _():
        out_ref[...] = jnp.zeros_like(out_ref)

    def accumulate(mask_oob_rows):
        pred = pred_ref[...].astype(jnp.float32)     # (1, block_r, LANE)
        label = label_ref[...].astype(jnp.float32)   # (1, block_r, LANE)

        valid = label != ignore_label
        if mask_oob_rows:
            # Partial last feature block: rows past r_total hold garbage from the
            # edge DMA (Pallas does not zero OOB reads).  Mask them and zero pred
            # there so garbage (possibly inf/NaN bits) never reaches the
            # transcendentals.
            row_ids = (jax.lax.broadcasted_iota(jnp.int32, pred.shape, 1)
                       + rb * block_r)
            in_range = row_ids < r_total
            valid = jnp.logical_and(valid, in_range)
            pred = jnp.where(in_range, pred, 0.0)

        # Reference zeroes the label at ignored positions.
        label = jnp.where(valid, label, 0.0)

        if not from_sigmoid:
            # relu(x) - x*y + softplus(-|x|)  (stable; exp/log1p go to the EUP)
            loss = (jnp.maximum(pred, 0.0) - pred * label
                    + jnp.log1p(jnp.exp(-jnp.abs(pred))))
        else:
            eps = 1e-12
            loss = -(jnp.log(pred + eps) * label
                     + jnp.log(1.0 - pred + eps) * (1.0 - label))

        # Single select folds the sample-weight mask (replaces cast + multiply).
        loss = jnp.where(valid, loss, 0.0)

        # Fold block_r rows into the 8-row accumulator (cheap VALU adds that hide
        # under the DMA); accumulator + finalize reduce stay 4 KiB for any block_r.
        partial = jnp.sum(loss.reshape(block_r // OUT_R, OUT_R, LANE), axis=0)
        out_ref[...] += partial[None]

    if r_total % block_r == 0:
        # Common aligned case: no iota / range-compare / pred-sanitization at all.
        accumulate(False)
    else:
        # Only the last feature block is partial; keep the steady-state path free
        # of the row-mask VALU work.
        @pl.when(rb != num_rb - 1)
        def _():
            accumulate(False)

        @pl.when(rb == num_rb - 1)
        def _():
            accumulate(True)

    # Finalize: one small cross-lane reduce, scaled by weight / true elem count.
    @pl.when(rb == num_rb - 1)
    def _():
        total = jnp.sum(out_ref[...])
        out_ref[...] = jnp.full_like(out_ref, total * scale)


def sigmoid_bce_loss(pred, label, *, from_sigmoid=False, weight=1.0,
                     ignore_label=-1):
    """Per-batch mean sigmoid BCE loss. pred/label: NCHW. Returns shape (N,) f32.

    Inputs are transported in their native dtype and cast to f32 in-kernel, so
    callers are encouraged to pass bf16 pred (and a narrow label dtype) to halve
    HBM traffic on this bandwidth-bound kernel.
    """
    label = label.reshape(pred.shape)            # label.view(pred.size())
    n = pred.shape[0]
    feat = int(math.prod(pred.shape[1:]))        # true per-batch element count

    pred_2d = pred.reshape(n, feat)
    label_2d = label.reshape(n, feat)

    # Pad (native dtype) only to a LANE multiple; padded labels carry
    # ignore_label so padded positions contribute zero loss.  Tiny feature
    # counts (< one 8x128 tile) pad to a full tile so the sublane fold stays
    # trivially aligned.
    feat_pad = max(_round_up(feat, LANE), OUT_R * LANE)
    if feat_pad != feat:
        pad = feat_pad - feat
        pred_2d = jnp.pad(pred_2d, ((0, 0), (0, pad)))
        label_2d = jnp.pad(label_2d, ((0, 0), (0, pad)),
                           constant_values=ignore_label)

    r_total = feat_pad // LANE                   # >= OUT_R
    block_r_max, vmem_limit = _block_cfg()
    block_r = min(block_r_max, (r_total // OUT_R) * OUT_R)   # multiple of 8
    num_rb = pl.cdiv(r_total, block_r)

    pred_t = pred_2d.reshape(n, r_total, LANE)   # layout-preserving reshape
    label_t = label_2d.reshape(n, r_total, LANE)

    kernel = functools.partial(
        _bce_kernel,
        from_sigmoid=bool(from_sigmoid),
        ignore_label=float(ignore_label),
        r_total=r_total,
        block_r=block_r,
        scale=float(weight) / float(feat),
    )

    cp_kwargs = dict(dimension_semantics=("parallel", "arbitrary"))
    if vmem_limit is not None:
        cp_kwargs["vmem_limit_bytes"] = int(vmem_limit)

    out = pl.pallas_call(
        kernel,
        out_shape=jax.ShapeDtypeStruct((n, OUT_R, LANE), jnp.float32),
        grid_spec=pltpu.PrefetchScalarGridSpec(
            num_scalar_prefetch=0,
            grid=(n, num_rb),
            in_specs=[
                pl.BlockSpec((1, block_r, LANE), lambda i, rb: (i, rb, 0)),
                pl.BlockSpec((1, block_r, LANE), lambda i, rb: (i, rb, 0)),
            ],
            out_specs=pl.BlockSpec((1, OUT_R, LANE), lambda i, rb: (i, 0, 0)),
        ),
        compiler_params=pltpu.CompilerParams(**cp_kwargs),
    )(pred_t, label_t)

    return out[:, 0, 0]


def _reference_loss(pred, label, *, from_sigmoid=False, weight=1.0,
                    ignore_label=-1):
    """Pure-JAX reference mirroring the PyTorch module."""
    label = label.reshape(pred.shape).astype(jnp.float32)
    pred = pred.astype(jnp.float32)
    sw = (label != ignore_label)
    label = jnp.where(sw, label, jnp.zeros_like(label))
    if not from_sigmoid:
        loss = jnp.maximum(pred, 0.0) - pred * label + jnp.log1p(jnp.exp(-jnp.abs(pred)))
    else:
        eps = 1e-12
        loss = -(jnp.log(pred + eps) * label + jnp.log(1.0 - pred + eps) * (1.0 - label))
    loss = weight * (loss * sw.astype(jnp.float32))
    return jnp.mean(loss.reshape(loss.shape[0], -1), axis=1)


if __name__ == "__main__":
    key = jax.random.PRNGKey(0)
    k1, k2, k3 = jax.random.split(key, 3)

    # Main check: lane-aligned features (feat = 4*16*16 = 1024).
    N, C, H, W = 2, 4, 16, 16
    pred = jax.random.normal(k1, (N, C, H, W), dtype=jnp.float32)
    label = (jax.random.uniform(k2, (N, C, H, W)) > 0.5).astype(jnp.float32)
    ignore_mask = jax.random.uniform(k3, (N, C, H, W)) < 0.1
    label = jnp.where(ignore_mask, jnp.full_like(label, -1.0), label)

    out = jax.block_until_ready(sigmoid_bce_loss(pred, label))
    ref = _reference_loss(pred, label)
    assert out.shape == (N,)
    assert jnp.allclose(out, ref, rtol=1e-5, atol=1e-5), (out, ref)

    # Ragged feature count (feat=300: exercises lane pad + tiny-tile fallback).
    k4, k5 = jax.random.split(k1)
    pred2 = jax.random.normal(k4, (2, 3, 10, 10), dtype=jnp.float32)
    label2 = (jax.random.uniform(k5, (2, 3, 10, 10)) > 0.5).astype(jnp.float32)
    out2 = jax.block_until_ready(sigmoid_bce_loss(pred2, label2))
    ref2 = _reference_loss(pred2, label2)
    assert jnp.allclose(out2, ref2, rtol=1e-5, atol=1e-5), (out2, ref2)

    # Lane-aligned but 8-row-unaligned (feat=1920 -> r_total=15): exercises the
    # partial-last-block row-mask path with no wrapper-side jnp.pad copy.
    k6, k7 = jax.random.split(k2)
    pred3 = jax.random.normal(k6, (2, 3, 16, 40), dtype=jnp.float32)
    label3 = (jax.random.uniform(k7, (2, 3, 16, 40)) > 0.5).astype(jnp.float32)
    out3 = jax.block_until_ready(sigmoid_bce_loss(pred3, label3))
    ref3 = _reference_loss(pred3, label3)
    assert jnp.allclose(out3, ref3, rtol=1e-5, atol=1e-5), (out3, ref3)

    # from_sigmoid=True path.
    pred_s = jax.nn.sigmoid(pred)
    out4 = jax.block_until_ready(sigmoid_bce_loss(pred_s, label, from_sigmoid=True))
    ref4 = _reference_loss(pred_s, label, from_sigmoid=True)
    assert jnp.allclose(out4, ref4, rtol=1e-5, atol=1e-5), (out4, ref4)

    print("KERNEL_OK")
</pallas_src>

<mosaic_0001>
module attributes {stable_mosaic.version = 11 : i64} {
  func.func @_bce_kernel(%arg0: i32, %arg1: i32, %arg2: memref<1x8x128xf32, #tpu.memory_space<vmem>>, %arg3: memref<1x8x128xf32, #tpu.memory_space<vmem>>, %arg4: memref<1x8x128xf32, #tpu.memory_space<vmem>>) attributes {dimension_semantics = [#tpu.dimension_semantics<parallel>, #tpu.dimension_semantics<arbitrary>], iteration_bounds = array<i64: 2, 1>, scalar_prefetch = 0 : i64, scratch_operands = 0 : i64, tpu.core_type = #tpu.core_type<tc>, window_params = [{transform_indices = @transform_0, window_bounds = array<i64: 1, 8, 128>}, {transform_indices = @transform_1, window_bounds = array<i64: 1, 8, 128>}, {transform_indices = @transform_2, window_bounds = array<i64: 1, 8, 128>}]} {
    %c0_i32 = arith.constant 0 : i32
    %0 = arith.cmpi eq, %arg1, %c0_i32 : i32
    %1 = arith.extui %0 : i1 to i32
    %c0_i32_0 = arith.constant 0 : i32
    %2 = arith.cmpi ne, %1, %c0_i32_0 : i32
    scf.if %2 {
      %cst_19 = arith.constant 0.000000e+00 : f32
      %29 = vector.broadcast %cst_19 : f32 to vector<1x8x128xf32>
      %c0_20 = arith.constant 0 : index
      %c0_21 = arith.constant 0 : index
      %c0_22 = arith.constant 0 : index
      %30 = vector.load %arg4[%c0_20, %c0_21, %c0_22] : memref<1x8x128xf32, #tpu.memory_space<vmem>>, vector<1x8x128xf32>
      tpu.vector_store %arg4[%c0_20, %c0_21, %c0_22], %29 {strides = array<i32>} : memref<1x8x128xf32, #tpu.memory_space<vmem>>, vector<1x8x128xf32>,
    } else {
    }
    %c0 = arith.constant 0 : index
    %c0_1 = arith.constant 0 : index
    %c0_2 = arith.constant 0 : index
    %3 = vector.load %arg2[%c0, %c0_1, %c0_2] : memref<1x8x128xf32, #tpu.memory_space<vmem>>, vector<1x8x128xf32>
    %c0_3 = arith.constant 0 : index
    %c0_4 = arith.constant 0 : index
    %c0_5 = arith.constant 0 : index
    %4 = vector.load %arg3[%c0_3, %c0_4, %c0_5] : memref<1x8x128xf32, #tpu.memory_space<vmem>>, vector<1x8x128xf32>
    %cst = arith.constant -1.000000e+00 : f32
    %5 = vector.broadcast %cst : f32 to vector<1x8x128xf32>
    %6 = arith.cmpf one, %4, %5 : vector<1x8x128xf32>
    %cst_6 = arith.constant 0.000000e+00 : f32
    %7 = vector.broadcast %cst_6 : f32 to vector<1x8x128xf32>
    %8 = arith.select %6, %4, %7 : vector<1x8x128xi1>, vector<1x8x128xf32>
    %cst_7 = arith.constant 0.000000e+00 : f32
    %9 = vector.broadcast %cst_7 : f32 to vector<1x8x128xf32>
    %10 = arith.maximumf %3, %9 : vector<1x8x128xf32>
    %11 = arith.mulf %3, %8 : vector<1x8x128xf32>
    %12 = arith.subf %10, %11 : vector<1x8x128xf32>
    %13 = math.absf %3 : vector<1x8x128xf32>
    %cst_8 = arith.constant 0.000000e+00 : f32
    %14 = vector.broadcast %cst_8 : f32 to vector<1x8x128xf32>
    %15 = arith.subf %14, %13 : vector<1x8x128xf32>
    %16 = math.exp %15 : vector<1x8x128xf32>
    %17 = math.log1p %16 : vector<1x8x128xf32>
    %18 = arith.addf %12, %17 : vector<1x8x128xf32>
    %cst_9 = arith.constant 0.000000e+00 : f32
    %19 = vector.broadcast %cst_9 : f32 to vector<1x8x128xf32>
    %20 = arith.select %6, %18, %19 : vector<1x8x128xi1>, vector<1x8x128xf32>
    %cst_10 = arith.constant dense<0.000000e+00> : vector<8x128xf32>
    %21 = vector.multi_reduction <add>, %20, %cst_10 [0] : vector<1x8x128xf32> to vector<8x128xf32>
    %c0_11 = arith.constant 0 : index
    %c0_12 = arith.constant 0 : index
    %c0_13 = arith.constant 0 : index
    %22 = vector.load %arg4[%c0_11, %c0_12, %c0_13] : memref<1x8x128xf32, #tpu.memory_space<vmem>>, vector<1x8x128xf32>
    %23 = vector.shape_cast %21 : vector<8x128xf32> to vector<1x8x128xf32>
    %24 = arith.addf %22, %23 : vector<1x8x128xf32>
    %c0_14 = arith.constant 0 : index
    %c0_15 = arith.constant 0 : index
    %c0_16 = arith.constant 0 : index
    %25 = vector.load %arg4[%c0_14, %c0_15, %c0_16] : memref<1x8x128xf32, #tpu.memory_space<vmem>>, vector<1x8x128xf32>
    tpu.vector_store %arg4[%c0_14, %c0_15, %c0_16], %24 {strides = array<i32>} : memref<1x8x128xf32, #tpu.memory_space<vmem>>, vector<1x8x128xf32>,
    %c0_i32_17 = arith.constant 0 : i32
    %26 = arith.cmpi eq, %arg1, %c0_i32_17 : i32
    %27 = arith.extui %26 : i1 to i32
    %c0_i32_18 = arith.constant 0 : i32
    %28 = arith.cmpi ne, %27, %c0_i32_18 : i32
    scf.if %28 {
      %c0_19 = arith.constant 0 : index
      %c0_20 = arith.constant 0 : index
      %c0_21 = arith.constant 0 : index
      %29 = vector.load %arg4[%c0_19, %c0_20, %c0_21] : memref<1x8x128xf32, #tpu.memory_space<vmem>>, vector<1x8x128xf32>
      %30 = vector.shape_cast %29 : vector<1x8x128xf32> to vector<1x1x8x128xf32>
      %cst_22 = arith.constant dense<0.000000e+00> : vector<1xf32>
      %31 = vector.multi_reduction <add>, %30, %cst_22 [1, 2, 3] : vector<1x1x8x128xf32> to vector<1xf32>
      %32 = vector.shape_cast %31 : vector<1xf32> to vector<1x1x1x1xf32>
      %33 = vector.extract %32[0, 0, 0, 0] : f32 from vector<1x1x1x1xf32>
      %cst_23 = arith.constant 9.765625E-4 : f32
      %34 = arith.mulf %33, %cst_23 : f32
      %35 = vector.broadcast %34 : f32 to vector<1x8x128xf32>
      %c0_24 = arith.constant 0 : index
      %c0_25 = arith.constant 0 : index
      %c0_26 = arith.constant 0 : index
      %36 = vector.load %arg4[%c0_24, %c0_25, %c0_26] : memref<1x8x128xf32, #tpu.memory_space<vmem>>, vector<1x8x128xf32>
      tpu.vector_store %arg4[%c0_24, %c0_25, %c0_26], %35 {strides = array<i32>} : memref<1x8x128xf32, #tpu.memory_space<vmem>>, vector<1x8x128xf32>,
    } else {
    }
    return
  }
  func.func @transform_0(%arg0: i32, %arg1: i32) -> (i32, i32, i32) {
    %c0_i32 = arith.constant 0 : i32
    %c0_i32_0 = arith.constant 0 : i32
    return %arg0, %arg1, %c0_i32 : i32, i32, i32
  }
  func.func @transform_1(%arg0: i32, %arg1: i32) -> (i32, i32, i32) {
    %c0_i32 = arith.constant 0 : i32
    %c0_i32_0 = arith.constant 0 : i32
    return %arg0, %arg1, %c0_i32 : i32, i32, i32
  }
  func.func @transform_2(%arg0: i32, %arg1: i32) -> (i32, i32, i32) {
    %c0_i32 = arith.constant 0 : i32
    %c0_i32_0 = arith.constant 0 : i32
    %c0_i32_1 = arith.constant 0 : i32
    return %arg0, %c0_i32, %c0_i32_0 : i32, i32, i32
  }
}

</mosaic_0001>

<llo_original>
// kernel: tpu_custom_call.1
$region0: #{tpu_custom_call.1}
  #allocation0 [shape = 'u32[]', space=smem, size = 0x4, offset = 0x4, fixed_abs, tag = 'smem constant byte address 0x4 - core index']
  #allocation1 [shape = 'u32[144,128]{1,0:T(1,128)}', space=vmem, size = 0x12000, scoped, tag = 'internal scratch']
  %s0 = inlined_call_operand.hbm [shape: f32[2,8,128], index: 0, kind: input, shape index: {}]
  %s1 = inlined_call_operand.hbm [shape: f32[2,8,128], index: 1, kind: input, shape index: {}]
  %s2 = inlined_call_operand.hbm [shape: f32[2,8,128], index: 2, kind: output, shape index: {}]
  %s3 = sld [smem:[#allocation0]]
  $region57: #{tpu_custom_call.1} parent=0
    _
  %s5 = ssub.s32 1, %s3
  %s6 = scalar_select 0, %s5, %s3
  $region1: #{tpu_custom_call.1} parent=0
    #allocation2 [shape = 'u8[8192]{0}', space=vmem, size = 0x2000, scoped, tag = 'input window, operand 0']
    #allocation3 [shape = 's32[2]{0}', space=sflag, size = 0x8, scoped, tag = 'scoped memory for tpu_custom_call.1']
    #allocation4 [shape = 's32[2]{0}', space=sflag, size = 0x8, scoped, tag = 'scoped memory for tpu_custom_call.1']
    #allocation5 [shape = 'u8[8192]{0}', space=vmem, size = 0x2000, scoped, tag = 'input window, operand 1']
    #allocation6 [shape = 's32[2]{0}', space=sflag, size = 0x8, scoped, tag = 'scoped memory for tpu_custom_call.1']
    #allocation7 [shape = 'u8[8192]{0}', space=vmem, size = 0x2000, scoped, tag = 'output window, operand 0']
    %7 = vsyncpa [#allocation3], 0
    %s8 = scalar_lea.sflag [#allocation3], 1
    %9 = vsyncpa %s8, 0
    %10 = vsyncpa [#allocation6], 0
    %s11 = scalar_lea.sflag [#allocation6], 1
    %12 = vsyncpa %s11, 0
    %13 = vsyncpa [#allocation4], 0
    %s14 = scalar_lea.sflag [#allocation4], 1
    %15 = vsyncpa %s14, 0
    loop: start=0, step=1, limit=4
    $region2: #{tpu_custom_call.1} parent=1 // loop_pre_header
      _
    $region3: #{tpu_custom_call.1} parent=1 // loop_header
      %s17 = sphi 0, %s21
      %p18 = scmp.ge.s32.totalorder %s17, 4
      %s24 = sphi 0, %s36
      %s25 = sphi 0, %s32
      %s26 = sphi 0, %s24
      %s27 = sphi 0, %s25
      %s28 = sphi 0, %s26
      %s29 = sphi 0, %s27
      %s41 = sphi 0, %s43
      %s44 = sphi 0, %s41
      %s45 = sphi 0, %s44
      %s61 = sphi 0, %s45
      %s69 = sphi 0, %s71
      %s72 = sphi 0, %s69
      %s73 = sphi 0, %s72
      %s89 = sphi 0, %s73
      %s95 = sphi 0, %s97
      %s98 = sphi 0, %s95
      %s99 = sphi 0, %s98
      %s115 = sphi 0, %s99
    $region4: #{tpu_custom_call.1} parent=1 // loop_header_branch
      %20 = sbr.rel (%p18) target = $region8
    $region5: #{tpu_custom_call.1} parent=1 // loop_body
      %s22 = ssub.s32 %s17, 1
      %s23 = ssub.s32 %s17, 2
      %s30 = sadd.s32 1, %s25
      %p31 = scmp.ge.s32.totalorder %s30, 1
      %s32 = scalar_select %p31, 0, %s30
      %s33 = sadd.s32 1, %s24
      %s34 = scalar_select %p31, %s33, %s24
      %p35 = scmp.ge.s32.totalorder %s34, 2
      %s36 = scalar_select %p35, 0, %s34
      %s37 = ssub.s32 %s24, %s36
      %s38 = ssub.s32 %s25, %s32
      %s39 = sor.u32 %s37, %s38
      %p40 = scmp.eq.s32.totalorder %s39, 0
      %s42 = sadd.s32 %s41, 1
      %s43 = scalar_select %p40, %s41, %s42
      %p46 = pneg %p40
      %p47 = scmp.eq.s32.totalorder %s17, 1
      %p48 = por %p46, %p47
      %p49 = scmp.ne.s32.totalorder %s41, %s44
      %p50 = scmp.eq.s32.totalorder %s17, 0
      %p51 = por %p49, %p50
      %p52 = scmp.ne.s32.totalorder %s41, %s44
      %p53 = scmp.eq.s32.totalorder %s22, 1
      %p54 = por %p52, %p53
      %p55 = scmp.ne.s32.totalorder %s44, %s45
      %p56 = scmp.eq.s32.totalorder %s22, 0
      %p57 = por %p55, %p56
      %p58 = scmp.ne.s32.totalorder %s44, %s45
      %p59 = scmp.eq.s32.totalorder %s23, 1
      %p60 = por %p58, %p59
      %p62 = scmp.ne.s32.totalorder %s45, %s61
      %p63 = scmp.eq.s32.totalorder %s23, 0
      %p64 = por %p62, %p63
      %s65 = ssub.s32 %s24, %s36
      %s66 = ssub.s32 %s25, %s32
      %s67 = sor.u32 %s65, %s66
      %p68 = scmp.eq.s32.totalorder %s67, 0
      %s70 = sadd.s32 %s69, 1
      %s71 = scalar_select %p68, %s69, %s70
      %p74 = pneg %p68
      %p75 = scmp.eq.s32.totalorder %s17, 1
      %p76 = por %p74, %p75
      %p77 = scmp.ne.s32.totalorder %s69, %s72
      %p78 = scmp.eq.s32.totalorder %s17, 0
      %p79 = por %p77, %p78
      %p80 = scmp.ne.s32.totalorder %s69, %s72
      %p81 = scmp.eq.s32.totalorder %s22, 1
      %p82 = por %p80, %p81
      %p83 = scmp.ne.s32.totalorder %s72, %s73
      %p84 = scmp.eq.s32.totalorder %s22, 0
      %p85 = por %p83, %p84
      %p86 = scmp.ne.s32.totalorder %s72, %s73
      %p87 = scmp.eq.s32.totalorder %s23, 1
      %p88 = por %p86, %p87
      %p90 = scmp.ne.s32.totalorder %s73, %s89
      %p91 = scmp.eq.s32.totalorder %s23, 0
      %p92 = por %p90, %p91
      %s93 = ssub.s32 %s24, %s36
      %p94 = scmp.eq.s32.totalorder %s93, 0
      %s96 = sadd.s32 %s95, 1
      %s97 = scalar_select %p94, %s95, %s96
      %p100 = pneg %p94
      %p101 = scmp.eq.s32.totalorder %s17, 1
      %p102 = por %p100, %p101
      %p103 = scmp.ne.s32.totalorder %s95, %s98
      %p104 = scmp.eq.s32.totalorder %s17, 0
      %p105 = por %p103, %p104
      %p106 = scmp.ne.s32.totalorder %s95, %s98
      %p107 = scmp.eq.s32.totalorder %s22, 1
      %p108 = por %p106, %p107
      %p109 = scmp.ne.s32.totalorder %s98, %s99
      %p110 = scmp.eq.s32.totalorder %s22, 0
      %p111 = por %p109, %p110
      %p112 = scmp.ne.s32.totalorder %s98, %s99
      %p113 = scmp.eq.s32.totalorder %s23, 1
      %p114 = por %p112, %p113
      %p116 = scmp.ne.s32.totalorder %s99, %s115
      %p117 = scmp.eq.s32.totalorder %s23, 0
      %p118 = por %p116, %p117
      %p119 = scmp.le.s32.totalorder 1, %s17
      %p120 = scmp.lt.s32.totalorder %s17, 3
      %p121 = pnand %p119, %p120
      %p122 = pneg %p121
      // Predicated region
      $region9: #{tpu_custom_call.1} parent=5 // pred_check
        _
      $region10: #{tpu_custom_call.1} parent=5 // pred_check_branch
        %124 = sbr.rel (%p121) target = $region12
      $region11: #{tpu_custom_call.1} parent=5 // pred_region
        %s125 = ssub.s32 %s17, 1
      $region12: #{tpu_custom_call.1} parent=5 // pred_fallthru
        _
      %p126 = scmp.lt.s32.totalorder %s17, 2
      // Predicated region
      $region13: #{tpu_custom_call.1} parent=5 // pred_check
        %p127 = pneg %p126
      $region14: #{tpu_custom_call.1} parent=5 // pred_check_branch
        %129 = sbr.rel (%p127) target = $region16
      $region15: #{tpu_custom_call.1} parent=5 // pred_region
        // Predicated region
        $region17: #{tpu_custom_call.1} parent=15 // pred_check
          %p130 = pneg %p51
        $region18: #{tpu_custom_call.1} parent=15 // pred_check_branch
          %132 = sbr.rel (%p130) target = $region20
        $region19: #{tpu_custom_call.1} parent=15 // pred_region
          %s133 = sand.u32 %s41, 1
          %s134 = scalar_lea.sflag [#allocation3], %s133
          %s135 = sand.u32 %s41, 1
          %s136 = smul.addr %s135, 8
          %s137 = scalar_lea.vmem [#allocation2], %s136
          %s139 = ssub.s32 128, 128
          %140 = vsyncadd %s134, %s139
          %s141 = sadd.s32 %s25, %s24
          %s142 = smul.addr %s141, 128
          %s143 = scalar_lea.hbm %s0, %s142
          %s145 = sshll.u32 %s137, 4
          %s146 = int_to_ptr.vmem [resolvable:$true] %s145
          %148 = dma.hbm_to_vmem [thread:$0]  %s143, 128, %s146, %s134
        $region20: #{tpu_custom_call.1} parent=15 // pred_fallthru
          _
        // Predicated region
        $region21: #{tpu_custom_call.1} parent=15 // pred_check
          %p149 = pneg %p79
        $region22: #{tpu_custom_call.1} parent=15 // pred_check_branch
          %151 = sbr.rel (%p149) target = $region24
        $region23: #{tpu_custom_call.1} parent=15 // pred_region
          %s152 = sand.u32 %s69, 1
          %s153 = scalar_lea.sflag [#allocation6], %s152
          %s154 = sand.u32 %s69, 1
          %s155 = smul.addr %s154, 8
          %s156 = scalar_lea.vmem [#allocation5], %s155
          %s158 = ssub.s32 128, 128
          %159 = vsyncadd %s153, %s158
          %s160 = sadd.s32 %s25, %s24
          %s161 = smul.addr %s160, 128
          %s162 = scalar_lea.hbm %s1, %s161
          %s164 = sshll.u32 %s156, 4
          %s165 = int_to_ptr.vmem [resolvable:$true] %s164
          %167 = dma.hbm_to_vmem [thread:$0]  %s162, 128, %s165, %s153
        $region24: #{tpu_custom_call.1} parent=15 // pred_fallthru
          _
      $region16: #{tpu_custom_call.1} parent=5 // pred_fallthru
        _
      %p168 = scmp.le.s32.totalorder 1, %s17
      %p169 = scmp.lt.s32.totalorder %s17, 3
      %p170 = pnand %p168, %p169
      %p171 = pneg %p170
      // Predicated region
      $region25: #{tpu_custom_call.1} parent=5 // pred_check
        _
      $region26: #{tpu_custom_call.1} parent=5 // pred_check_branch
        %173 = sbr.rel (%p170) target = $region28
      $region27: #{tpu_custom_call.1} parent=5 // pred_region
        %s174 = ssub.s32 %s17, 1
        %s175 = sand.u32 %s44, 1
        %s176 = scalar_lea.sflag [#allocation3], %s175
        %s177 = sand.u32 %s44, 1
        %s178 = smul.addr %s177, 8
        %s179 = scalar_lea.vmem [#allocation2], %s178
        // Predicated region
        $region29: #{tpu_custom_call.1} parent=27 // pred_check
          %p180 = pneg %p57
        $region30: #{tpu_custom_call.1} parent=27 // pred_check_branch
          %182 = sbr.rel (%p180) target = $region32
        $region31: #{tpu_custom_call.1} parent=27 // pred_region
          %183 = dma.done %s176, 128
        $region32: #{tpu_custom_call.1} parent=27 // pred_fallthru
          _
        %s184 = sand.u32 %s72, 1
        %s185 = scalar_lea.sflag [#allocation6], %s184
        %s186 = sand.u32 %s72, 1
        %s187 = smul.addr %s186, 8
        %s188 = scalar_lea.vmem [#allocation5], %s187
        // Predicated region
        $region33: #{tpu_custom_call.1} parent=27 // pred_check
          %p189 = pneg %p85
        $region34: #{tpu_custom_call.1} parent=27 // pred_check_branch
          %191 = sbr.rel (%p189) target = $region36
        $region35: #{tpu_custom_call.1} parent=27 // pred_region
          %192 = dma.done %s185, 128
        $region36: #{tpu_custom_call.1} parent=27 // pred_fallthru
          _
        %s193 = sand.u32 %s44, 1
        %s194 = scalar_lea.sflag [#allocation3], %s193
        %s195 = sand.u32 %s44, 1
        %s196 = smul.addr %s195, 8
        %s197 = scalar_lea.vmem [#allocation2], %s196
        %p198 = pneg %p57
        %p199 = pneg %p54
        %s200 = sand.u32 %s72, 1
        %s201 = scalar_lea.sflag [#allocation6], %s200
        %s202 = sand.u32 %s72, 1
        %s203 = smul.addr %s202, 8
        %s204 = scalar_lea.vmem [#allocation5], %s203
        %p205 = pneg %p85
        %p206 = pneg %p82
        %p207 = pneg %p111
        %p208 = pneg %p108
        %s209 = sand.u32 %s98, 1
        %s210 = scalar_lea.sflag [#allocation4], %s209
        %s211 = sand.u32 %s98, 1
        %s212 = smul.addr %s211, 8
        %s213 = scalar_lea.vmem [#allocation7], %s212
        %p214 = scmp.eq.s32.totalorder %s27, 0
        // Predicated region
        $region37: #{tpu_custom_call.1} parent=27 // pred_check
          %p215 = pneg %p214
        $region38: #{tpu_custom_call.1} parent=27 // pred_check_branch
          %217 = sbr.rel (%p215) target = $region40
        $region39: #{tpu_custom_call.1} parent=27 // pred_region
          %218 = vst [vmem:[%s213] sm:$0xff] 0.0
        $region40: #{tpu_custom_call.1} parent=27 // pred_fallthru
          _
        %v219 = vld [vmem:[%s179] sm:$0xff]
        %v220 = vld [vmem:[%s188] sm:$0xff]
        %vm221 = vcmp.ne.f32.partialorder %v220, -1.0
        %v222 = vsel %vm221, %v220, 0.0
        %v223 = vmax.f32 %v219, 0.0
        %v224 = vmul.f32 %v219, %v222
        %v225 = vsub.f32 %v223, %v224
        %v226 = vand.u32 2147483647, %v219
        %v227 = vsub.f32 0.0, %v226
        %v228 = vmul.f32 %v227, 1.442695
        %v229 = vpow.pop %v228
        %v230 = vadd.f32 %v229, 1.0
        %v231 = vlog2.pop %v230
        %v232 = vmul.f32 %v231, 0.6931472
        %v233 = vmul.f32 -0.5, %v229
        %v234 = vadd.f32 %v233, 1.0
        %v235 = vmul.f32 %v234, %v229
        %v236 = vand.u32 2147483647, %v229
        %vm237 = vcmp.lt.f32.partialorder %v236, 0.0004427343
        %v238 = vsel %vm237, %v235, %v232
        %v239 = vadd.f32 %v225, %v238
        %v240 = vsel %vm221, %v239, 0.0
        %v241 = vadd.f32 %v240, 0.0
        %v242 = vld [vmem:[%s213] sm:$0xff]
        %v243 = vadd.f32 %v242, %v241
        %244 = vst [vmem:[%s213] sm:$0xff] %v243
        // Predicated region
        $region41: #{tpu_custom_call.1} parent=27 // pred_check
          %p245 = pneg %p214
        $region42: #{tpu_custom_call.1} parent=27 // pred_check_branch
          %247 = sbr.rel (%p245) target = $region44
        $region43: #{tpu_custom_call.1} parent=27 // pred_region
          %v248 = vld [vmem:[%s213] sm:$0xff]
          %249 = vadd.xlane.f32.xlu0 %v248
          %v250 = vpop.xlane.xlu0 %249
          %v251 = vrot.slane %v250, 4
          %v252 = vadd.f32 %v250, %v251
          %v253 = vrot.slane %v252, 2
          %v254 = vadd.f32 %v252, %v253
          %v255 = vrot.slane %v254, 1
          %v256 = vadd.f32 %v254, %v255
          %s257 = vtos %v256
          %s258 = smul.f32 %s257, 0.0009765625
          %v259 = vstv %s258
          %260 = vst [vmem:[%s213] sm:$0xff] %v259
        $region44: #{tpu_custom_call.1} parent=27 // pred_fallthru
          _
        %s261 = sand.u32 %s98, 1
        %s262 = scalar_lea.sflag [#allocation4], %s261
        %s263 = sand.u32 %s98, 1
        %s264 = smul.addr %s263, 8
        %s265 = scalar_lea.vmem [#allocation7], %s264
        // Predicated region
        $region45: #{tpu_custom_call.1} parent=27 // pred_check
          %p266 = pneg %p108
        $region46: #{tpu_custom_call.1} parent=27 // pred_check_branch
          %268 = sbr.rel (%p266) target = $region48
        $region47: #{tpu_custom_call.1} parent=27 // pred_region
          %s270 = ssub.s32 128, 128
          %271 = vsyncadd %s262, %s270
          %s272 = smul.addr %s26, 128
          %s273 = scalar_lea.hbm %s2, %s272
          %s275 = sshll.u32 %s265, 4
          %s276 = int_to_ptr.vmem [resolvable:$true] %s275
          %278 = dma.vmem_to_hbm [thread:$0]  %s276, 128, %s273, %s262
        $region48: #{tpu_custom_call.1} parent=27 // pred_fallthru
          _
      $region28: #{tpu_custom_call.1} parent=5 // pred_fallthru
        _
      %p279 = scmp.le.s32.totalorder 2, %s17
      // Predicated region
      $region49: #{tpu_custom_call.1} parent=5 // pred_check
        %p280 = pneg %p279
      $region50: #{tpu_custom_call.1} parent=5 // pred_check_branch
        %282 = sbr.rel (%p280) target = $region52
      $region51: #{tpu_custom_call.1} parent=5 // pred_region
        %s283 = ssub.s32 %s17, 2
        // Predicated region
        $region53: #{tpu_custom_call.1} parent=51 // pred_check
          %p284 = pneg %p114
        $region54: #{tpu_custom_call.1} parent=51 // pred_check_branch
          %286 = sbr.rel (%p284) target = $region56
        $region55: #{tpu_custom_call.1} parent=51 // pred_region
          %s287 = sand.u32 %s99, 1
          %s288 = scalar_lea.sflag [#allocation4], %s287
          %s289 = sand.u32 %s99, 1
          %s290 = smul.addr %s289, 8
          %s291 = scalar_lea.vmem [#allocation7], %s290
          %292 = dma.done %s288, 128
        $region56: #{tpu_custom_call.1} parent=51 // pred_fallthru
          _
      $region52: #{tpu_custom_call.1} parent=5 // pred_fallthru
        _
    $region6: #{tpu_custom_call.1} parent=1 // loop_footer
      %s21 = sadd.s32 1, %s17
    $region7: #{tpu_custom_call.1} parent=1 // loop_footer_branch
      %16 = sbr.rel target = $region3
    $region8: #{tpu_custom_call.1} parent=1 // loop_exit
      _
    %293 = vsyncpa [#allocation3], 1
    %s294 = scalar_lea.sflag [#allocation3], 1
    %295 = vsyncpa %s294, 1
    %296 = vsyncpa [#allocation6], 1
    %s297 = scalar_lea.sflag [#allocation6], 1
    %298 = vsyncpa %s297, 1
    %299 = vsyncpa [#allocation4], 1
    %s300 = scalar_lea.sflag [#allocation4], 1
    %301 = vsyncpa %s300, 1

</llo_original>
